<compile_context>
chip_gen: v7x
topology: tpu7x:2x2x1
jax: 0.10.0
libtpu: 0.0.40
codegen_flags: <defaults>
</compile_context>

<pallas_src>
import functools

import jax
import jax.numpy as jnp
from jax import lax
from jax.experimental import pallas as pl
from jax.experimental.pallas import tpu as pltpu


def _faithful_kernel(x_ref, w_qvr_ref, b_qvr_ref, wl_ref, bl_ref, o_ref, *,
                     compute_dtype):
    """One batch tile of the full (faithful) forward pass.

    x_ref    : (Bt, L, Dp)   input tile (compute_dtype)
    w_qvr_ref: (Dp, 3*Dp)    [Wq^T | Wv^T | Wr^T] (compute_dtype)
    b_qvr_ref: (1, 3*Dp)     [bq | bv | br]       (f32)
    wl_ref   : (1, Dp)       final Linear weight  (f32)
    bl_ref   : (1, 1)        final Linear bias    (f32)
    o_ref    : (1, 1, Bt)    sigmoid outputs for this batch tile (f32)
    """
    Bt, L, Dp = x_ref.shape

    # Fused q/v/r projection: one (Bt*L, Dp) @ (Dp, 3*Dp) MXU matmul, f32 accumulate.
    x2 = x_ref[...].reshape(Bt * L, Dp)
    qvr = jnp.dot(x2, w_qvr_ref[...], preferred_element_type=jnp.float32)
    qvr = (qvr + b_qvr_ref[...]).reshape(Bt, L, 3 * Dp)
    # Dp is a multiple of 128, so these lane slices are (8,128)-tile aligned.
    q = qvr[:, :, 0:Dp].astype(compute_dtype)
    v = qvr[:, :, Dp:2 * Dp].astype(compute_dtype)
    r = qvr[:, :, 2 * Dp:3 * Dp]                       # stays f32 until scaled

    # Transposed scores: scores_t[b, j, i] = q[b, i, :] . v[b, j, :]
    # (torch: bmm(q, v^T)[b, i, j]).  Keeping the query index i on the lane (last)
    # axis makes the Softmax(dim=1) reduction a lane-axis reduction.
    scores_t = lax.dot_general(v, q, (((2,), (2,)), ((0,), (0,))),
                               preferred_element_type=jnp.float32)      # (Bt, Lj, Li)

    # Softmax(dim=1): normalize over i (last axis here).  Instead of dividing all
    # L^2 entries, invert the (Bt, L, 1) denominator once and scale the r rows —
    # mathematically identical (scaling commutes with the j-contraction below).
    m = jnp.max(scores_t, axis=2, keepdims=True)
    e = jnp.exp(scores_t - m)                                           # (Bt, Lj, Li)
    denom = jnp.sum(e, axis=2, keepdims=True)                           # (Bt, Lj, 1)
    r_scaled = (r * (1.0 / denom)).astype(compute_dtype)                # (Bt, Lj, Dp)

    # emb[b, i, d] = sum_j attn[b, i, j] * r[b, j, d]
    emb = lax.dot_general(e.astype(compute_dtype), r_scaled,
                          (((1,), (1,)), ((0,), (0,))),
                          preferred_element_type=jnp.float32)           # (Bt, Li, Dp)

    # Fold .sum(dim=1) into the final Linear: contract Dp on the MXU first, then
    # reduce the small L axis, instead of a Dp-wide sublane reduction + matvec.
    lw = lax.dot_general(wl_ref[...], emb, (((1,), (2,)), ((), ())),
                         preferred_element_type=jnp.float32)            # (1, Bt, Li)
    logit = jnp.sum(lw, axis=2) + bl_ref[...]                           # (1, Bt)
    o_ref[0] = jax.nn.sigmoid(logit)


def _collapsed_kernel(x_ref, w_r_ref, b_r_ref, wl_ref, bl_ref, o_ref):
    """Algebraically collapsed path.

    Softmax(dim=1) columns sum to 1, so attention(x).sum(dim=1) == r(x).sum(dim=1)
    exactly; q/v projections, scores, softmax and attn@r are mathematically dead.
    """
    Bt, L, Dp = x_ref.shape
    x2 = x_ref[...].reshape(Bt * L, Dp)
    r = jnp.dot(x2, w_r_ref[...], preferred_element_type=jnp.float32) + b_r_ref[...]
    r = r.reshape(Bt, L, Dp)
    lw = lax.dot_general(wl_ref[...], r, (((1,), (2,)), ((), ())),
                         preferred_element_type=jnp.float32)            # (1, Bt, L)
    logit = jnp.sum(lw, axis=2) + bl_ref[...]                           # (1, Bt)
    o_ref[0] = jax.nn.sigmoid(logit)


def _est_vmem_bytes(Bt, L, Dp, c_bytes, collapsed):
    """Conservative per-grid-step VMEM estimate (double-buffered I/O + intermediates)."""
    n_proj = 1 if collapsed else 3
    x_tile = 2 * Bt * L * Dp * c_bytes                        # double-buffered x tile
    weights = 2 * (Dp * n_proj * Dp * c_bytes                 # fused projection weight
                   + n_proj * Dp * 4 + Dp * 4 + 4)            # biases + final linear
    qvr = Bt * L * n_proj * Dp * 4                            # projection accumulator
    out = 2 * Bt * 4
    if collapsed:
        return x_tile + weights + qvr + out
    qvr_slices = 3 * Bt * L * Dp * 4                          # q / v / r_scaled copies
    scores = 3 * Bt * L * L * 4                               # scores_t, e, e cast
    emb = Bt * L * Dp * 4
    return x_tile + weights + qvr + qvr_slices + scores + emb + out


def log_linear_attention(x, W_q, b_q, W_v, b_v, W_r, b_r, W_l, b_l,
                         *, compute_dtype=jnp.bfloat16, collapse_attention=False):
    """x: (B, L, D).  Weights follow nn.Linear convention: W_* is (out, in).

    compute_dtype=jnp.bfloat16 (default) runs all matmuls on the bf16-native MXU
    path with f32 accumulation; pass jnp.float32 for ~1e-6 parity with an f32
    reference.  collapse_attention=True applies the exact Softmax(dim=1)+sum(dim=1)
    algebraic collapse (pooled == r.sum(dim=1)).
    """
    B, L, D = x.shape
    Dp = max(128, -(-D // 128) * 128)           # pad feature dim to lane-dense 128
    pad_d = Dp - D

    def pad_wt(W):                              # (out=D, in=D) -> transposed (Dp, Dp)
        return jnp.pad(W.T, ((0, pad_d), (0, pad_d)))

    def pad_b(b):
        return jnp.pad(b, (0, pad_d))

    if collapse_attention:
        w_proj = pad_wt(W_r).astype(compute_dtype)                          # (Dp, Dp)
        b_proj = pad_b(b_r).reshape(1, Dp).astype(jnp.float32)
        kernel = _collapsed_kernel
        n_proj = 1
    else:
        w_proj = jnp.concatenate([pad_wt(W_q), pad_wt(W_v), pad_wt(W_r)],
                                 axis=1).astype(compute_dtype)              # (Dp, 3Dp)
        b_proj = jnp.concatenate([pad_b(b_q), pad_b(b_v), pad_b(b_r)]
                                 ).reshape(1, 3 * Dp).astype(jnp.float32)
        kernel = functools.partial(_faithful_kernel, compute_dtype=compute_dtype)
        n_proj = 3

    wl2 = jnp.pad(W_l.reshape(1, D), ((0, 0), (0, pad_d))).astype(jnp.float32)
    bl2 = b_l.reshape(1, 1).astype(jnp.float32)

    # --- Generation-aware VMEM budget & batch tiling --------------------------------
    try:
        vmem_cap = int(pltpu.get_tpu_info().vmem_capacity_bytes)
    except Exception:
        vmem_cap = 64 << 20                       # conservative fallback (v7x per-TC)
    budget = int(vmem_cap * 0.7)                  # leave headroom for compiler scratch
    c_bytes = jnp.dtype(compute_dtype).itemsize

    target_rows = 512                             # Bt*L rows feeding the MXU M dim
    Bt = max(1, min(B, max(1, target_rows // max(L, 1))))
    while Bt > 1 and _est_vmem_bytes(Bt, L, Dp, c_bytes, collapse_attention) > budget:
        Bt = (Bt + 1) // 2
    # Megacore (v7x) split: only force >=2 grid steps when each half keeps MXU-sized
    # tiles; on single-TC parts / small B this stays a single full-batch step.
    if B >= 2 and -(-B // Bt) < 2 and (B // 2) * L >= 256:
        Bt = -(-B // 2)
    num_blocks = -(-B // Bt)
    B_pad = num_blocks * Bt

    est = _est_vmem_bytes(Bt, L, Dp, c_bytes, collapse_attention)
    vmem_limit = int(min(vmem_cap, max(est + (8 << 20), 32 << 20)))

    xc = jnp.pad(x.astype(compute_dtype), ((0, B_pad - B), (0, 0), (0, pad_d)))

    wdim = n_proj * Dp
    out = pl.pallas_call(
        kernel,
        out_shape=jax.ShapeDtypeStruct((num_blocks, 1, Bt), jnp.float32),
        grid=(num_blocks,),
        in_specs=[
            pl.BlockSpec((Bt, L, Dp), lambda b: (b, 0, 0)),       # x tile
            pl.BlockSpec((Dp, wdim), lambda b: (0, 0)),           # fused projection W
            pl.BlockSpec((1, wdim), lambda b: (0, 0)),            # fused projection bias
            pl.BlockSpec((1, Dp), lambda b: (0, 0)),              # final Linear weight
            pl.BlockSpec((1, 1), lambda b: (0, 0)),               # final Linear bias
        ],
        out_specs=pl.BlockSpec((1, 1, Bt), lambda b: (b, 0, 0)),
        compiler_params=pltpu.CompilerParams(
            dimension_semantics=("parallel",),
            vmem_limit_bytes=vmem_limit),
    )(xc, w_proj, b_proj, wl2, bl2)

    return out.reshape(B_pad, 1)[:B]


def _ref_forward(x, W_q, b_q, W_v, b_v, W_r, b_r, W_l, b_l):
    """Pure-JAX reference mirroring the PyTorch forward."""
    q = x @ W_q.T + b_q
    v = x @ W_v.T + b_v
    r = x @ W_r.T + b_r
    scores = jnp.einsum("bld,bmd->blm", q, v)         # bmm(q, v.transpose(1, 2))
    attn = jax.nn.softmax(scores, axis=1)             # Softmax(dim=1)
    emb = jnp.einsum("blm,bmd->bld", attn, r)         # bmm(attention, r)
    pooled = emb.sum(axis=1)                           # .sum(dim=1)
    out = pooled @ W_l.T + b_l
    return jax.nn.sigmoid(out)


def _linear_init(key, out_dim, in_dim):
    """Deterministic nn.Linear-style init: U(-1/sqrt(in), 1/sqrt(in))."""
    kw, kb = jax.random.split(key)
    bound = 1.0 / jnp.sqrt(jnp.float32(in_dim))
    W = jax.random.uniform(kw, (out_dim, in_dim), jnp.float32, -bound, bound)
    b = jax.random.uniform(kb, (out_dim,), jnp.float32, -bound, bound)
    return W, b


if __name__ == "__main__":
    B, L, D = 2, 8, 32

    root = jax.random.PRNGKey(0)
    k_x, k_q, k_v, k_r, k_l = jax.random.split(root, 5)

    x = jax.random.normal(k_x, (B, L, D), jnp.float32)
    W_q, b_q = _linear_init(k_q, D, D)
    W_v, b_v = _linear_init(k_v, D, D)
    W_r, b_r = _linear_init(k_r, D, D)
    W_l, b_l = _linear_init(k_l, 1, D)

    ref = _ref_forward(x, W_q, b_q, W_v, b_v, W_r, b_r, W_l, b_l)

    # Faithful f32 path: tight parity with the f32 reference.
    out_f32 = jax.block_until_ready(
        log_linear_attention(x, W_q, b_q, W_v, b_v, W_r, b_r, W_l, b_l,
                             compute_dtype=jnp.float32))
    assert out_f32.shape == (B, 1), out_f32.shape
    assert jnp.allclose(out_f32, ref, atol=1e-5, rtol=1e-5), (out_f32, ref)

    # Default bf16 MXU fast path (f32 accumulation): looser tolerance expected.
    out_bf16 = jax.block_until_ready(
        log_linear_attention(x, W_q, b_q, W_v, b_v, W_r, b_r, W_l, b_l))
    assert jnp.allclose(out_bf16, ref, atol=5e-2, rtol=5e-2), (out_bf16, ref)

    # Algebraically collapsed path (exact Softmax(dim=1)+sum(dim=1) identity).
    out_col = jax.block_until_ready(
        log_linear_attention(x, W_q, b_q, W_v, b_v, W_r, b_r, W_l, b_l,
                             compute_dtype=jnp.float32, collapse_attention=True))
    assert jnp.allclose(out_col, ref, atol=1e-5, rtol=1e-5), (out_col, ref)

    print("KERNEL_OK")
</pallas_src>

<mosaic_0001>
module attributes {stable_mosaic.version = 11 : i64} {
  func.func @_faithful_kernel(%arg0: i32, %arg1: memref<2x8x128xf32, #tpu.memory_space<vmem>>, %arg2: memref<128x384xf32, #tpu.memory_space<vmem>>, %arg3: memref<1x384xf32, #tpu.memory_space<vmem>>, %arg4: memref<1x128xf32, #tpu.memory_space<vmem>>, %arg5: memref<1x1xf32, #tpu.memory_space<vmem>>, %arg6: memref<1x1x2xf32, #tpu.memory_space<vmem>>) attributes {dimension_semantics = [#tpu.dimension_semantics<parallel>], iteration_bounds = array<i64: 1>, scalar_prefetch = 0 : i64, scratch_operands = 0 : i64, tpu.core_type = #tpu.core_type<tc>, window_params = [{transform_indices = @transform_0, window_bounds = array<i64: 2, 8, 128>}, {pipeline_mode = #tpu.pipeline_mode<synchronous>, transform_indices = @transform_1, window_bounds = array<i64: 128, 384>}, {pipeline_mode = #tpu.pipeline_mode<synchronous>, transform_indices = @transform_2, window_bounds = array<i64: 1, 384>}, {pipeline_mode = #tpu.pipeline_mode<synchronous>, transform_indices = @transform_3, window_bounds = array<i64: 1, 128>}, {pipeline_mode = #tpu.pipeline_mode<synchronous>, transform_indices = @transform_4, window_bounds = array<i64: 1, 1>}, {transform_indices = @transform_5, window_bounds = array<i64: 1, 1, 2>}]} {
    %c0 = arith.constant 0 : index
    %c0_0 = arith.constant 0 : index
    %c0_1 = arith.constant 0 : index
    %0 = vector.load %arg1[%c0, %c0_0, %c0_1] : memref<2x8x128xf32, #tpu.memory_space<vmem>>, vector<2x8x128xf32>
    %1 = vector.shape_cast %0 : vector<2x8x128xf32> to vector<16x128xf32>
    %c0_2 = arith.constant 0 : index
    %c0_3 = arith.constant 0 : index
    %2 = vector.load %arg2[%c0_2, %c0_3] : memref<128x384xf32, #tpu.memory_space<vmem>>, vector<128x384xf32>
    %cst = arith.constant dense<0.000000e+00> : vector<16x384xf32>
    %3 = tpu.matmul %1, %2, %cst {dimension_numbers = #tpu.dot_dimension_numbers<[1], [0], [0], [1], [0, 0, 1, 1], [], []>} : vector<16x128xf32>, vector<128x384xf32>, vector<16x384xf32> -> vector<16x384xf32>
    %c0_4 = arith.constant 0 : index
    %c0_5 = arith.constant 0 : index
    %4 = vector.load %arg3[%c0_4, %c0_5] : memref<1x384xf32, #tpu.memory_space<vmem>>, vector<1x384xf32>
    %5 = vector.broadcast %4 : vector<1x384xf32> to vector<16x384xf32>
    %6 = arith.addf %3, %5 : vector<16x384xf32>
    %7 = vector.shape_cast %6 : vector<16x384xf32> to vector<2x8x384xf32>
    %8 = vector.extract_strided_slice %7 {offsets = [0, 0, 0], sizes = [2, 8, 128], strides = [1, 1, 1]} : vector<2x8x384xf32> to vector<2x8x128xf32>
    %9 = vector.extract_strided_slice %7 {offsets = [0, 0, 128], sizes = [2, 8, 128], strides = [1, 1, 1]} : vector<2x8x384xf32> to vector<2x8x128xf32>
    %10 = vector.extract_strided_slice %7 {offsets = [0, 0, 256], sizes = [2, 8, 128], strides = [1, 1, 1]} : vector<2x8x384xf32> to vector<2x8x128xf32>
    %cst_6 = arith.constant dense<0.000000e+00> : vector<2x8x8xf32>
    %11 = tpu.matmul %9, %8, %cst_6 {dimension_numbers = #tpu.dot_dimension_numbers<[2], [2], [1], [1], [0, 0, 0, 1, 1, 1], [0], [0]>} : vector<2x8x128xf32>, vector<2x8x128xf32>, vector<2x8x8xf32> -> vector<2x8x8xf32>
    %cst_7 = arith.constant dense<0xFF800000> : vector<2x8xf32>
    %12 = vector.multi_reduction <maximumf>, %11, %cst_7 [2] : vector<2x8x8xf32> to vector<2x8xf32>
    %13 = vector.shape_cast %12 : vector<2x8xf32> to vector<2x8x1xf32>
    %14 = vector.broadcast %13 : vector<2x8x1xf32> to vector<2x8x8xf32>
    %15 = arith.subf %11, %14 : vector<2x8x8xf32>
    %16 = math.exp %15 : vector<2x8x8xf32>
    %cst_8 = arith.constant dense<0.000000e+00> : vector<2x8xf32>
    %17 = vector.multi_reduction <add>, %16, %cst_8 [2] : vector<2x8x8xf32> to vector<2x8xf32>
    %18 = vector.shape_cast %17 : vector<2x8xf32> to vector<2x8x1xf32>
    %cst_9 = arith.constant 1.000000e+00 : f32
    %19 = vector.broadcast %cst_9 : f32 to vector<2x8x1xf32>
    %20 = arith.divf %19, %18 : vector<2x8x1xf32>
    %21 = vector.broadcast %20 : vector<2x8x1xf32> to vector<2x8x128xf32>
    %22 = arith.mulf %10, %21 : vector<2x8x128xf32>
    %cst_10 = arith.constant dense<0.000000e+00> : vector<2x8x128xf32>
    %23 = tpu.matmul %16, %22, %cst_10 {dimension_numbers = #tpu.dot_dimension_numbers<[1], [1], [2], [2], [0, 0, 0, 2, 1, 2], [0], [0]>} : vector<2x8x8xf32>, vector<2x8x128xf32>, vector<2x8x128xf32> -> vector<2x8x128xf32>
    %c0_11 = arith.constant 0 : index
    %c0_12 = arith.constant 0 : index
    %24 = vector.load %arg4[%c0_11, %c0_12] : memref<1x128xf32, #tpu.memory_space<vmem>>, vector<1x128xf32>
    %cst_13 = arith.constant dense<0.000000e+00> : vector<1x2x8xf32>
    %25 = tpu.matmul %24, %23, %cst_13 {dimension_numbers = #tpu.dot_dimension_numbers<[1], [2], [0], [0, 1], [0, 0, 1, 0, 1, 1], [], []>} : vector<1x128xf32>, vector<2x8x128xf32>, vector<1x2x8xf32> -> vector<1x2x8xf32>
    %cst_14 = arith.constant dense<0.000000e+00> : vector<1x2xf32>
    %26 = vector.multi_reduction <add>, %25, %cst_14 [2] : vector<1x2x8xf32> to vector<1x2xf32>
    %c0_15 = arith.constant 0 : index
    %c0_16 = arith.constant 0 : index
    %27 = vector.load %arg5[%c0_15, %c0_16] : memref<1x1xf32, #tpu.memory_space<vmem>>, vector<1x1xf32>
    %28 = vector.broadcast %27 : vector<1x1xf32> to vector<1x2xf32>
    %29 = arith.addf %26, %28 : vector<1x2xf32>
    %30 = arith.negf %29 : vector<1x2xf32>
    %31 = math.exp %30 : vector<1x2xf32>
    %cst_17 = arith.constant 1.000000e+00 : f32
    %32 = vector.broadcast %cst_17 : f32 to vector<1x2xf32>
    %33 = arith.addf %32, %31 : vector<1x2xf32>
    %34 = arith.divf %32, %33 : vector<1x2xf32>
    %c0_18 = arith.constant 0 : index
    %c0_19 = arith.constant 0 : index
    %c0_20 = arith.constant 0 : index
    %35 = vector.load %arg6[%c0_18, %c0_19, %c0_20] : memref<1x1x2xf32, #tpu.memory_space<vmem>>, vector<1x1x2xf32>
    %36 = vector.shape_cast %35 : vector<1x1x2xf32> to vector<1x2xf32>
    %37 = vector.shape_cast %34 : vector<1x2xf32> to vector<1x1x2xf32>
    tpu.vector_store %arg6[%c0_18, %c0_19, %c0_20], %37 {strides = array<i32>} : memref<1x1x2xf32, #tpu.memory_space<vmem>>, vector<1x1x2xf32>,
    return
  }
  func.func @transform_0(%arg0: i32) -> (i32, i32, i32) {
    %c0_i32 = arith.constant 0 : i32
    %c0_i32_0 = arith.constant 0 : i32
    %c0_i32_1 = arith.constant 0 : i32
    return %arg0, %c0_i32, %c0_i32_0 : i32, i32, i32
  }
  func.func @transform_1(%arg0: i32) -> (i32, i32) {
    %c0_i32 = arith.constant 0 : i32
    %c0_i32_0 = arith.constant 0 : i32
    %c0_i32_1 = arith.constant 0 : i32
    return %c0_i32, %c0_i32_0 : i32, i32
  }
  func.func @transform_2(%arg0: i32) -> (i32, i32) {
    %c0_i32 = arith.constant 0 : i32
    %c0_i32_0 = arith.constant 0 : i32
    %c0_i32_1 = arith.constant 0 : i32
    return %c0_i32, %c0_i32_0 : i32, i32
  }
  func.func @transform_3(%arg0: i32) -> (i32, i32) {
    %c0_i32 = arith.constant 0 : i32
    %c0_i32_0 = arith.constant 0 : i32
    %c0_i32_1 = arith.constant 0 : i32
    return %c0_i32, %c0_i32_0 : i32, i32
  }
  func.func @transform_4(%arg0: i32) -> (i32, i32) {
    %c0_i32 = arith.constant 0 : i32
    %c0_i32_0 = arith.constant 0 : i32
    %c0_i32_1 = arith.constant 0 : i32
    return %c0_i32, %c0_i32_0 : i32, i32
  }
  func.func @transform_5(%arg0: i32) -> (i32, i32, i32) {
    %c0_i32 = arith.constant 0 : i32
    %c0_i32_0 = arith.constant 0 : i32
    %c0_i32_1 = arith.constant 0 : i32
    return %arg0, %c0_i32, %c0_i32_0 : i32, i32, i32
  }
}

</mosaic_0001>

<llo_original>
// kernel: tpu_custom_call.1
$region0: #{tpu_custom_call.1}
  #allocation0 [shape = 'u32[]', space=smem, size = 0x4, offset = 0x4, fixed_abs, tag = 'smem constant byte address 0x4 - core index']
  #allocation1 [shape = 'u32[144,128]{1,0:T(1,128)}', space=vmem, size = 0x12000, scoped, tag = 'internal scratch']
  #allocation2 [shape = 'f32[1,1]{1,0:T(1,128)S(1)}', space=vmem, size = 0x200, scoped, tag = 'scoped memory for tpu_custom_call.1']
  %s0 = inlined_call_operand.hbm [shape: f32[2,8,128], index: 0, kind: input, shape index: {}]
  %s1 = inlined_call_operand.hbm [shape: f32[128,384], index: 1, kind: input, shape index: {}]
  %s2 = inlined_call_operand.vmem [shape: f32[1,384], index: 2, kind: input, shape index: {}]
  %s3 = inlined_call_operand.vmem [shape: f32[1,128], index: 3, kind: input, shape index: {}]
  %s4 = inlined_call_operand.<no memory space> [shape: f32[1,1], index: 4, kind: input, shape index: {}]
  %s5 = inlined_call_operand.hbm [shape: f32[1,1,2], index: 5, kind: output, shape index: {}]
  %s6 = sld [smem:[#allocation0]]
  $region38: #{tpu_custom_call.1} parent=0
    _
  %s8 = ssub.s32 1, %s6
  %s9 = scalar_select 0, %s8, %s6
  %v10 = vstv %s4
  %11 = vst [vmem:[#allocation2] sm:$0x1] %v10
  $region1: #{tpu_custom_call.1} parent=0
    #allocation3 [shape = 'u8[8192]{0}', space=vmem, size = 0x2000, scoped, tag = 'input window, operand 0, single buffered']
    #allocation4 [shape = 's32[1]{0}', space=sflag, size = 0x4, scoped, tag = 'scoped memory for tpu_custom_call.1']
    #allocation5 [shape = 's32[1]{0}', space=sflag, size = 0x4, scoped, tag = 'scoped memory for tpu_custom_call.1']
    #allocation6 [shape = 'u8[196608]{0}', space=vmem, size = 0x30000, scoped, tag = 'input window, operand 1, single buffered']
    #allocation7 [shape = 's32[1]{0}', space=sflag, size = 0x4, scoped, tag = 'scoped memory for tpu_custom_call.1']
    #allocation8 [shape = 'u8[512]{0}', space=vmem, size = 0x400, scoped, tag = 'output window, operand 0, single buffered']
    %12 = vsyncpa [#allocation4], 0
    %13 = vsyncpa [#allocation7], 0
    %14 = vsyncpa [#allocation5], 0
    // Predicated region
    $region2: #{tpu_custom_call.1} parent=1 // pred_check
      _
    $region3: #{tpu_custom_call.1} parent=1 // pred_check_branch
      %16 = sbr.rel (0) target = $region5
    $region4: #{tpu_custom_call.1} parent=1 // pred_region
      %s18 = ssub.s32 256, 256
      %19 = vsyncadd [#allocation4], %s18
      %s20 = sshll.u32 [#allocation3], 4
      %s21 = int_to_ptr.vmem [resolvable:$true] %s20
      %26 = dma.hbm_to_vmem [thread:$0]  %s0, 256, %s21, [#allocation4], 128, 128, 8
    $region5: #{tpu_custom_call.1} parent=1 // pred_fallthru
      _
    // Predicated region
    $region6: #{tpu_custom_call.1} parent=1 // pred_check
      _
    $region7: #{tpu_custom_call.1} parent=1 // pred_check_branch
      %28 = sbr.rel (0) target = $region9
    $region8: #{tpu_custom_call.1} parent=1 // pred_region
      %s30 = ssub.s32 6144, 6144
      %31 = vsyncadd [#allocation7], %s30
      %s32 = sshll.u32 [#allocation6], 4
      %s33 = int_to_ptr.vmem [resolvable:$true] %s32
      %38 = dma.hbm_to_vmem [thread:$0]  %s1, 6144, %s33, [#allocation7], 384, 384, 24
    $region9: #{tpu_custom_call.1} parent=1 // pred_fallthru
      _
    // Predicated region
    $region10: #{tpu_custom_call.1} parent=1 // pred_check
      _
    $region11: #{tpu_custom_call.1} parent=1 // pred_check_branch
      %40 = sbr.rel (0) target = $region13
    $region12: #{tpu_custom_call.1} parent=1 // pred_region
      _
    $region13: #{tpu_custom_call.1} parent=1 // pred_fallthru
      _
    // Predicated region
    $region14: #{tpu_custom_call.1} parent=1 // pred_check
      _
    $region15: #{tpu_custom_call.1} parent=1 // pred_check_branch
      %42 = sbr.rel (0) target = $region17
    $region16: #{tpu_custom_call.1} parent=1 // pred_region
      _
    $region17: #{tpu_custom_call.1} parent=1 // pred_fallthru
      _
    // Predicated region
    $region18: #{tpu_custom_call.1} parent=1 // pred_check
      _
    $region19: #{tpu_custom_call.1} parent=1 // pred_check_branch
      %44 = sbr.rel (0) target = $region21
    $region20: #{tpu_custom_call.1} parent=1 // pred_region
      _
    $region21: #{tpu_custom_call.1} parent=1 // pred_fallthru
      _
    // Predicated region
    $region22: #{tpu_custom_call.1} parent=1 // pred_check
      _
    $region23: #{tpu_custom_call.1} parent=1 // pred_check_branch
      %46 = sbr.rel (0) target = $region25
    $region24: #{tpu_custom_call.1} parent=1 // pred_region
      %47 = dma.done [#allocation4], 256
    $region25: #{tpu_custom_call.1} parent=1 // pred_fallthru
      _
    // Predicated region
    $region26: #{tpu_custom_call.1} parent=1 // pred_check
      _
    $region27: #{tpu_custom_call.1} parent=1 // pred_check_branch
      %49 = sbr.rel (0) target = $region29
    $region28: #{tpu_custom_call.1} parent=1 // pred_region
      %50 = dma.done [#allocation7], 6144
    $region29: #{tpu_custom_call.1} parent=1 // pred_fallthru
      _
    %v51 = vld [vmem:[#allocation3] sm:$0xff]
    %v52 = vld [vmem:[#allocation3 + $0x8] sm:$0xff]
    %v53 = vld [vmem:[#allocation6] sm:$0xff]
    %v54 = vld [vmem:[#allocation6 + $0x8] sm:$0xff]
    %v55 = vld [vmem:[#allocation6 + $0x10] sm:$0xff]
    %v56 = vld [vmem:[#allocation6 + $0x18] sm:$0xff]
    %v57 = vld [vmem:[#allocation6 + $0x20] sm:$0xff]
    %v58 = vld [vmem:[#allocation6 + $0x28] sm:$0xff]
    %v59 = vld [vmem:[#allocation6 + $0x30] sm:$0xff]
    %v60 = vld [vmem:[#allocation6 + $0x38] sm:$0xff]
    %v61 = vld [vmem:[#allocation6 + $0x40] sm:$0xff]
    %v62 = vld [vmem:[#allocation6 + $0x48] sm:$0xff]
    %v63 = vld [vmem:[#allocation6 + $0x50] sm:$0xff]
    %v64 = vld [vmem:[#allocation6 + $0x58] sm:$0xff]
    %v65 = vld [vmem:[#allocation6 + $0x60] sm:$0xff]
    %v66 = vld [vmem:[#allocation6 + $0x68] sm:$0xff]
    %v67 = vld [vmem:[#allocation6 + $0x70] sm:$0xff]
    %v68 = vld [vmem:[#allocation6 + $0x78] sm:$0xff]
    %v69 = vld [vmem:[#allocation6 + $0x80] sm:$0xff]
    %v70 = vld [vmem:[#allocation6 + $0x88] sm:$0xff]
    %v71 = vld [vmem:[#allocation6 + $0x90] sm:$0xff]
    %v72 = vld [vmem:[#allocation6 + $0x98] sm:$0xff]
    %v73 = vld [vmem:[#allocation6 + $0xa0] sm:$0xff]
    %v74 = vld [vmem:[#allocation6 + $0xa8] sm:$0xff]
    %v75 = vld [vmem:[#allocation6 + $0xb0] sm:$0xff]
    %v76 = vld [vmem:[#allocation6 + $0xb8] sm:$0xff]
    %v77 = vld [vmem:[#allocation6 + $0xc0] sm:$0xff]
    %v78 = vld [vmem:[#allocation6 + $0xc8] sm:$0xff]
    %v79 = vld [vmem:[#allocation6 + $0xd0] sm:$0xff]
    %v80 = vld [vmem:[#allocation6 + $0xd8] sm:$0xff]
    %v81 = vld [vmem:[#allocation6 + $0xe0] sm:$0xff]
    %v82 = vld [vmem:[#allocation6 + $0xe8] sm:$0xff]
    %v83 = vld [vmem:[#allocation6 + $0xf0] sm:$0xff]
    %v84 = vld [vmem:[#allocation6 + $0xf8] sm:$0xff]
    %v85 = vld [vmem:[#allocation6 + $0x100] sm:$0xff]
    %v86 = vld [vmem:[#allocation6 + $0x108] sm:$0xff]
    %v87 = vld [vmem:[#allocation6 + $0x110] sm:$0xff]
    %v88 = vld [vmem:[#allocation6 + $0x118] sm:$0xff]
    %v89 = vld [vmem:[#allocation6 + $0x120] sm:$0xff]
    %v90 = vld [vmem:[#allocation6 + $0x128] sm:$0xff]
    %v91 = vld [vmem:[#allocation6 + $0x130] sm:$0xff]
    %v92 = vld [vmem:[#allocation6 + $0x138] sm:$0xff]
    %v93 = vld [vmem:[#allocation6 + $0x140] sm:$0xff]
    %v94 = vld [vmem:[#allocation6 + $0x148] sm:$0xff]
    %v95 = vld [vmem:[#allocation6 + $0x150] sm:$0xff]
    %v96 = vld [vmem:[#allocation6 + $0x158] sm:$0xff]
    %v97 = vld [vmem:[#allocation6 + $0x160] sm:$0xff]
    %v98 = vld [vmem:[#allocation6 + $0x168] sm:$0xff]
    %v99 = vld [vmem:[#allocation6 + $0x170] sm:$0xff]
    %v100 = vld [vmem:[#allocation6 + $0x178] sm:$0xff]
    %v101 = vld [vmem:[%s2] sm:$0x7]
    %v103 = vlaneseq
    %v104 = vshrl.u32 %v103, 7
    %v105 = vsub.s32 0, %v104
    %v106 = vrot.slane %v101, %v105
    %v107 = vlaneseq
    %v108 = vshrl.u32 %v107, 7
    %v109 = vsub.s32 1, %v108
    %v110 = vrot.slane %v101, %v109
    %v111 = vlaneseq
    %v112 = vshrl.u32 %v111, 7
    %v113 = vsub.s32 2, %v112
    %v114 = vrot.slane %v101, %v113
    %118 = vmatprep.subr.mxu0 %v54
    %119 = vmatpush1.msra.mxu0 %v53
    %120 = vmatprep.subr.mxu0 %v57
    %121 = vmatpush1.msra.mxu0 %v56
    %122 = vmatprep.subr.mxu0 %v60
    %123 = vmatpush1.msra.mxu0 %v59
    %124 = vmatprep.subr.mxu0 %v63
    %125 = vmatpush1.msra.mxu0 %v62
    %126 = vmatprep.subr.mxu0 %v66
    %127 = vmatpush1.msra.mxu0 %v65
    %128 = vmatprep.subr.mxu0 %v69
    %129 = vmatpush1.msra.mxu0 %v68
    %130 = vmatprep.subr.mxu0 %v72
    %131 = vmatpush1.msra.mxu0 %v71
    %132 = vmatprep.subr.mxu0 %v75
    %133 = vmatpush1.msra.mxu0 %v74
    %134 = vmatprep.subr.mxu0 %v78
    %135 = vmatpush1.msra.mxu0 %v77
    %136 = vmatprep.subr.mxu0 %v81
    %137 = vmatpush1.msra.mxu0 %v80
    %138 = vmatprep.subr.mxu0 %v84
    %139 = vmatpush1.msra.mxu0 %v83
    %140 = vmatprep.subr.mxu0 %v87
    %141 = vmatpush1.msra.mxu0 %v86
    %142 = vmatprep.subr.mxu0 %v90
    %143 = vmatpush1.msra.mxu0 %v89
    %144 = vmatprep.subr.mxu0 %v93
    %145 = vmatpush1.msra.mxu0 %v92
    %146 = vmatprep.subr.mxu0 %v96
    %147 = vmatpush1.msra.mxu0 %v95
    %148 = vmatprep.subr.mxu0 %v99
    %149 = vmatpush1.msra.mxu0 %v98
    %150 = vmatprep.subr.mxu0 0.0
    %151 = vmatpush1.msra.mxu0 0.0
    %152 = vmatprep.subr.mxu0 0.0
    %153 = vmatpush1.msra.mxu0 0.0
    %154 = vmatprep.subr.mxu0 0.0
    %155 = vmatpush1.msra.mxu0 0.0
    %156 = vmatprep.subr.mxu0 0.0
    %157 = vmatpush1.msra.mxu0 0.0
    %158 = vmatprep.subr.mxu0 0.0
    %159 = vmatpush1.msra.mxu0 0.0
    %160 = vmatprep.subr.mxu0 0.0
    %161 = vmatpush1.msra.mxu0 0.0
    %162 = vmatprep.subr.mxu0 0.0
    %163 = vmatpush1.msra.mxu0 0.0
    %164 = vmatprep.subr.mxu0 0.0
    %165 = vmatpush1.msra.mxu0 0.0
    %166 = vmatprep.subr.mxu0 0.0
    %167 = vmatpush1.msra.mxu0 0.0
    %168 = vmatprep.subr.mxu0 0.0
    %169 = vmatpush1.msra.mxu0 0.0
    %170 = vmatprep.subr.mxu0 0.0
    %171 = vmatpush1.msra.mxu0 0.0
    %172 = vmatprep.subr.mxu0 0.0
    %173 = vmatpush1.msra.mxu0 0.0
    %174 = vmatprep.subr.mxu0 0.0
    %175 = vmatpush1.msra.mxu0 0.0
    %176 = vmatprep.subr.mxu0 0.0
    %177 = vmatpush1.msra.mxu0 0.0
    %178 = vmatprep.subr.mxu0 0.0
    %179 = vmatpush1.msra.mxu0 0.0
    %180 = vmatprep.subr.mxu0 0.0
    %181 = vmatpush1.msra.mxu0 0.0
    %182 = vmatprep.mubr.f32.mxu0 0.0
    %183 = vmatmul.mubr.f32.gmra.mrb[0].mxu0 %v51
    %v184 = vpop.f32.mrb[0].mxu0
    %v185 = vadd.f32 %v106, %v184
    %v186 = vpop.f32.mrb[0].mxu0
    %v187 = vadd.f32 %v110, %v186
    %188 = vmatprep.mubr.f32.mxu0 0.0
    %189 = vmatmul.mubr.f32.gmra.mrb[0].mxu0 %v52
    %v190 = vpop.f32.mrb[0].mxu0
    %v191 = vadd.f32 %v106, %v190
    %v192 = vpop.f32.mrb[0].mxu0
    %v193 = vadd.f32 %v110, %v192
    %194 = vdwg.mxu0
    %195 = vmatprep.subr.mxu0 0.0
    %196 = vmatpush1.msra.mxu0 %v55
    %197 = vmatprep.subr.mxu0 0.0
    %198 = vmatpush1.msra.mxu0 %v58
    %199 = vmatprep.subr.mxu0 0.0
    %200 = vmatpush1.msra.mxu0 %v61
    %201 = vmatprep.subr.mxu0 0.0
    %202 = vmatpush1.msra.mxu0 %v64
    %203 = vmatprep.subr.mxu0 0.0
    %204 = vmatpush1.msra.mxu0 %v67
    %205 = vmatprep.subr.mxu0 0.0
    %206 = vmatpush1.msra.mxu0 %v70
    %207 = vmatprep.subr.mxu0 0.0
    %208 = vmatpush1.msra.mxu0 %v73
    %209 = vmatprep.subr.mxu0 0.0
    %210 = vmatpush1.msra.mxu0 %v76
    %211 = vmatprep.subr.mxu0 0.0
    %212 = vmatpush1.msra.mxu0 %v79
    %213 = vmatprep.subr.mxu0 0.0
    %214 = vmatpush1.msra.mxu0 %v82
    %215 = vmatprep.subr.mxu0 0.0
    %216 = vmatpush1.msra.mxu0 %v85
    %217 = vmatprep.subr.mxu0 0.0
    %218 = vmatpush1.msra.mxu0 %v88
    %219 = vmatprep.subr.mxu0 0.0
    %220 = vmatpush1.msra.mxu0 %v91
    %221 = vmatprep.subr.mxu0 0.0
    %222 = vmatpush1.msra.mxu0 %v94
    %223 = vmatprep.subr.mxu0 0.0
    %224 = vmatpush1.msra.mxu0 %v97
    %225 = vmatprep.subr.mxu0 0.0
    %226 = vmatpush1.msra.mxu0 %v100
    %227 = vmatprep.subr.mxu0 0.0
    %228 = vmatpush1.msra.mxu0 0.0
    %229 = vmatprep.subr.mxu0 0.0
    %230 = vmatpush1.msra.mxu0 0.0
    %231 = vmatprep.subr.mxu0 0.0
    %232 = vmatpush1.msra.mxu0 0.0
    %233 = vmatprep.subr.mxu0 0.0
    %234 = vmatpush1.msra.mxu0 0.0
    %235 = vmatprep.subr.mxu0 0.0
    %236 = vmatpush1.msra.mxu0 0.0
    %237 = vmatprep.subr.mxu0 0.0
    %238 = vmatpush1.msra.mxu0 0.0
    %239 = vmatprep.subr.mxu0 0.0
    %240 = vmatpush1.msra.mxu0 0.0
    %241 = vmatprep.subr.mxu0 0.0
    %242 = vmatpush1.msra.mxu0 0.0
    %243 = vmatprep.subr.mxu0 0.0
    %244 = vmatpush1.msra.mxu0 0.0
    %245 = vmatprep.subr.mxu0 0.0
    %246 = vmatpush1.msra.mxu0 0.0
    %247 = vmatprep.subr.mxu0 0.0
    %248 = vmatpush1.msra.mxu0 0.0
    %249 = vmatprep.subr.mxu0 0.0
    %250 = vmatpush1.msra.mxu0 0.0
    %251 = vmatprep.subr.mxu0 0.0
    %252 = vmatpush1.msra.mxu0 0.0
    %253 = vmatprep.subr.mxu0 0.0
    %254 = vmatpush1.msra.mxu0 0.0
    %255 = vmatprep.subr.mxu0 0.0
    %256 = vmatpush1.msra.mxu0 0.0
    %257 = vmatprep.subr.mxu0 0.0
    %258 = vmatpush1.msra.mxu0 0.0
    %259 = vmatprep.mubr.f32.mxu0 0.0
    %260 = vmatmul.mubr.f32.gmra.mrb[0].mxu0 %v51
    %v261 = vpop.f32.mrb[0].mxu0
    %v262 = vadd.f32 %v114, %v261
    %v263 = vpop.f32.mrb[0].mxu0
    %264 = vmatprep.mubr.f32.mxu0 0.0
    %265 = vmatmul.mubr.f32.gmra.mrb[0].mxu0 %v52
    %v266 = vpop.f32.mrb[0].mxu0
    %v267 = vadd.f32 %v114, %v266
    %v268 = vpop.f32.mrb[0].mxu0
    %269 = vdwg.mxu0
    %270 = vmatprep.subr.mxu0 0.0
    %271 = vmatpush1.xpose.msra.mxu0 %v185
    %272 = vmatprep.subr.mxu0 0.0
    %273 = vmatpush1.xpose.msra.mxu0 0.0
    %274 = vmatprep.subr.mxu0 0.0
    %275 = vmatpush1.xpose.msra.mxu0 0.0
    %276 = vmatprep.subr.mxu0 0.0
    %277 = vmatpush1.xpose.msra.mxu0 0.0
    %278 = vmatprep.subr.mxu0 0.0
    %279 = vmatpush1.xpose.msra.mxu0 0.0
    %280 = vmatprep.subr.mxu0 0.0
    %281 = vmatpush1.xpose.msra.mxu0 0.0
    %282 = vmatprep.subr.mxu0 0.0
    %283 = vmatpush1.xpose.msra.mxu0 0.0
    %284 = vmatprep.subr.mxu0 0.0
    %285 = vmatpush1.xpose.msra.mxu0 0.0
    %286 = vmatprep.subr.mxu0 0.0
    %287 = vmatpush1.xpose.msra.mxu0 0.0
    %288 = vmatprep.subr.mxu0 0.0
    %289 = vmatpush1.xpose.msra.mxu0 0.0
    %290 = vmatprep.subr.mxu0 0.0
    %291 = vmatpush1.xpose.msra.mxu0 0.0
    %292 = vmatprep.subr.mxu0 0.0
    %293 = vmatpush1.xpose.msra.mxu0 0.0
    %294 = vmatprep.subr.mxu0 0.0
    %295 = vmatpush1.xpose.msra.mxu0 0.0
    %296 = vmatprep.subr.mxu0 0.0
    %297 = vmatpush1.xpose.msra.mxu0 0.0
    %298 = vmatprep.subr.mxu0 0.0
    %299 = vmatpush1.xpose.msra.mxu0 0.0
    %300 = vmatprep.subr.mxu0 0.0
    %301 = vmatpush1.xpose.msra.mxu0 0.0
    %302 = vmatprep.subr.mxu0 0.0
    %303 = vmatpush1.xpose.msra.mxu0 0.0
    %304 = vmatprep.subr.mxu0 0.0
    %305 = vmatpush1.xpose.msra.mxu0 0.0
    %306 = vmatprep.subr.mxu0 0.0
    %307 = vmatpush1.xpose.msra.mxu0 0.0
    %308 = vmatprep.subr.mxu0 0.0
    %309 = vmatpush1.xpose.msra.mxu0 0.0
    %310 = vmatprep.subr.mxu0 0.0
    %311 = vmatpush1.xpose.msra.mxu0 0.0
    %312 = vmatprep.subr.mxu0 0.0
    %313 = vmatpush1.xpose.msra.mxu0 0.0
    %314 = vmatprep.subr.mxu0 0.0
    %315 = vmatpush1.xpose.msra.mxu0 0.0
    %316 = vmatprep.subr.mxu0 0.0
    %317 = vmatpush1.xpose.msra.mxu0 0.0
    %318 = vmatprep.subr.mxu0 0.0
    %319 = vmatpush1.xpose.msra.mxu0 0.0
    %320 = vmatprep.subr.mxu0 0.0
    %321 = vmatpush1.xpose.msra.mxu0 0.0
    %322 = vmatprep.subr.mxu0 0.0
    %323 = vmatpush1.xpose.msra.mxu0 0.0
    %324 = vmatprep.subr.mxu0 0.0
    %325 = vmatpush1.xpose.msra.mxu0 0.0
    %326 = vmatprep.subr.mxu0 0.0
    %327 = vmatpush1.xpose.msra.mxu0 0.0
    %328 = vmatprep.subr.mxu0 0.0
    %329 = vmatpush1.xpose.msra.mxu0 0.0
    %330 = vmatprep.subr.mxu0 0.0
    %331 = vmatpush1.xpose.msra.mxu0 0.0
    %332 = vmatprep.subr.mxu0 0.0
    %333 = vmatpush1.xpose.msra.mxu0 0.0
    %334 = vmatprep.mubr.f32.mxu0 0.0
    %335 = vmatmul.mubr.f32.gmra.mrb[0].mxu0 %v187
    %v336 = vpop.f32.mrb[0].mxu0
    %v337 = vadd.f32 0.0, %v336
    %v338 = vpop.f32.mrb[0].mxu0
    %339 = vdwg.mxu0
    %340 = vmatprep.subr.mxu0 0.0
    %341 = vmatpush1.xpose.msra.mxu0 %v191
    %342 = vmatprep.subr.mxu0 0.0
    %343 = vmatpush1.xpose.msra.mxu0 0.0
    %344 = vmatprep.subr.mxu0 0.0
    %345 = vmatpush1.xpose.msra.mxu0 0.0
    %346 = vmatprep.subr.mxu0 0.0
    %347 = vmatpush1.xpose.msra.mxu0 0.0
    %348 = vmatprep.subr.mxu0 0.0
    %349 = vmatpush1.xpose.msra.mxu0 0.0
    %350 = vmatprep.subr.mxu0 0.0
    %351 = vmatpush1.xpose.msra.mxu0 0.0
    %352 = vmatprep.subr.mxu0 0.0
    %353 = vmatpush1.xpose.msra.mxu0 0.0
    %354 = vmatprep.subr.mxu0 0.0
    %355 = vmatpush1.xpose.msra.mxu0 0.0
    %356 = vmatprep.subr.mxu0 0.0
    %357 = vmatpush1.xpose.msra.mxu0 0.0
    %358 = vmatprep.subr.mxu0 0.0
    %359 = vmatpush1.xpose.msra.mxu0 0.0
    %360 = vmatprep.subr.mxu0 0.0
    %361 = vmatpush1.xpose.msra.mxu0 0.0
    %362 = vmatprep.subr.mxu0 0.0
    %363 = vmatpush1.xpose.msra.mxu0 0.0
    %364 = vmatprep.subr.mxu0 0.0
    %365 = vmatpush1.xpose.msra.mxu0 0.0
    %366 = vmatprep.subr.mxu0 0.0
    %367 = vmatpush1.xpose.msra.mxu0 0.0
    %368 = vmatprep.subr.mxu0 0.0
    %369 = vmatpush1.xpose.msra.mxu0 0.0
    %370 = vmatprep.subr.mxu0 0.0
    %371 = vmatpush1.xpose.msra.mxu0 0.0
    %372 = vmatprep.subr.mxu0 0.0
    %373 = vmatpush1.xpose.msra.mxu0 0.0
    %374 = vmatprep.subr.mxu0 0.0
    %375 = vmatpush1.xpose.msra.mxu0 0.0
    %376 = vmatprep.subr.mxu0 0.0
    %377 = vmatpush1.xpose.msra.mxu0 0.0
    %378 = vmatprep.subr.mxu0 0.0
    %379 = vmatpush1.xpose.msra.mxu0 0.0
    %380 = vmatprep.subr.mxu0 0.0
    %381 = vmatpush1.xpose.msra.mxu0 0.0
    %382 = vmatprep.subr.mxu0 0.0
    %383 = vmatpush1.xpose.msra.mxu0 0.0
    %384 = vmatprep.subr.mxu0 0.0
    %385 = vmatpush1.xpose.msra.mxu0 0.0
    %386 = vmatprep.subr.mxu0 0.0
    %387 = vmatpush1.xpose.msra.mxu0 0.0
    %388 = vmatprep.subr.mxu0 0.0
    %389 = vmatpush1.xpose.msra.mxu0 0.0
    %390 = vmatprep.subr.mxu0 0.0
    %391 = vmatpush1.xpose.msra.mxu0 0.0
    %392 = vmatprep.subr.mxu0 0.0
    %393 = vmatpush1.xpose.msra.mxu0 0.0
    %394 = vmatprep.subr.mxu0 0.0
    %395 = vmatpush1.xpose.msra.mxu0 0.0
    %396 = vmatprep.subr.mxu0 0.0
    %397 = vmatpush1.xpose.msra.mxu0 0.0
    %398 = vmatprep.subr.mxu0 0.0
    %399 = vmatpush1.xpose.msra.mxu0 0.0
    %400 = vmatprep.subr.mxu0 0.0
    %401 = vmatpush1.xpose.msra.mxu0 0.0
    %402 = vmatprep.subr.mxu0 0.0
    %403 = vmatpush1.xpose.msra.mxu0 0.0
    %404 = vmatprep.mubr.f32.mxu0 0.0
    %405 = vmatmul.mubr.f32.gmra.mrb[0].mxu0 %v193
    %v406 = vpop.f32.mrb[0].mxu0
    %v407 = vadd.f32 0.0, %v406
    %v408 = vpop.f32.mrb[0].mxu0
    %409 = vdwg.mxu0
    %vm410 = vcmask 64512
    %v411 = vsel %vm410, %v337, -inf
    %412 = vmax.xlane.f32.xlu0 %v411
    %v413 = vpop.xlane.xlu0 %412
    %v414 = vsel %vm410, %v407, -inf
    %415 = vmax.xlane.f32.xlu0 %v414
    %v416 = vpop.xlane.xlu0 %415
    %v417 = vsub.f32 %v337, %v413
    %v418 = vsub.f32 %v407, %v416
    %v419 = vmul.f32 %v417, 1.442695
    %v420 = vpow.pop %v419
    %v421 = vmul.f32 %v418, 1.442695
    %v422 = vpow.pop %v421
    %v423 = vsel %vm410, %v420, 0.0
    %424 = vadd.xlane.f32.xlu0 %v423
    %v425 = vpop.xlane.xlu0 %424
    %v426 = vsel %vm410, %v422, 0.0
    %427 = vadd.xlane.f32.xlu0 %v426
    %v428 = vpop.xlane.xlu0 %427
    %v429 = vrcp.pop %v425
    %v430 = vmul.f32 1.0, %v429
    %v431 = vrcp.pop %v428
    %v432 = vmul.f32 1.0, %v431
    %v433 = vmul.f32 %v262, %v430
    %v434 = vmul.f32 %v267, %v432
    %435 = vxpose.xlu0.b32.start [1/16] %v420, 128
    %436 = vxpose.xlu0.b32.cont [2/16] 0.0, 128
    %437 = vxpose.xlu0.b32.cont [3/16] 0.0, 128
    %438 = vxpose.xlu0.b32.cont [4/16] 0.0, 128
    %439 = vxpose.xlu0.b32.cont [5/16] 0.0, 128
    %440 = vxpose.xlu0.b32.cont [6/16] 0.0, 128
    %441 = vxpose.xlu0.b32.cont [7/16] 0.0, 128
    %442 = vxpose.xlu0.b32.cont [8/16] 0.0, 128
    %443 = vxpose.xlu0.b32.cont [9/16] 0.0, 128
    %444 = vxpose.xlu0.b32.cont [10/16] 0.0, 128
    %445 = vxpose.xlu0.b32.cont [11/16] 0.0, 128
    %446 = vxpose.xlu0.b32.cont [12/16] 0.0, 128
    %447 = vxpose.xlu0.b32.cont [13/16] 0.0, 128
    %448 = vxpose.xlu0.b32.cont [14/16] 0.0, 128
    %449 = vxpose.xlu0.b32.cont [15/16] 0.0, 128
    %450 = vxpose.xlu0.b32.end [16/16] 0.0, 128
    %v451 = vpop.trf.xlu0
    %v452 = vpop.trf.xlu0
    %v453 = vpop.trf.xlu0
    %v454 = vpop.trf.xlu0
    %v455 = vpop.trf.xlu0
    %v456 = vpop.trf.xlu0
    %v457 = vpop.trf.xlu0
    %v458 = vpop.trf.xlu0
    %v459 = vpop.trf.xlu0
    %v460 = vpop.trf.xlu0
    %v461 = vpop.trf.xlu0
    %v462 = vpop.trf.xlu0
    %v463 = vpop.trf.xlu0
    %v464 = vpop.trf.xlu0
    %v465 = vpop.trf.xlu0
    %v466 = vpop.trf.xlu0
    %v468 = vsel %vm410, %v451, 0
    %470 = vmatprep.subr.mxu0 0.0
    %471 = vmatpush1.msra.mxu0 %v433
    %472 = vmatprep.subr.mxu0 0.0
    %473 = vmatpush1.msra.mxu0 0.0
    %474 = vmatprep.subr.mxu0 0.0
    %475 = vmatpush1.msra.mxu0 0.0
    %476 = vmatprep.subr.mxu0 0.0
    %477 = vmatpush1.msra.mxu0 0.0
    %478 = vmatprep.subr.mxu0 0.0
    %479 = vmatpush1.msra.mxu0 0.0
    %480 = vmatprep.subr.mxu0 0.0
    %481 = vmatpush1.msra.mxu0 0.0
    %482 = vmatprep.subr.mxu0 0.0
    %483 = vmatpush1.msra.mxu0 0.0
    %484 = vmatprep.subr.mxu0 0.0
    %485 = vmatpush1.msra.mxu0 0.0
    %486 = vmatprep.subr.mxu0 0.0
    %487 = vmatpush1.msra.mxu0 0.0
    %488 = vmatprep.subr.mxu0 0.0
    %489 = vmatpush1.msra.mxu0 0.0
    %490 = vmatprep.subr.mxu0 0.0
    %491 = vmatpush1.msra.mxu0 0.0
    %492 = vmatprep.subr.mxu0 0.0
    %493 = vmatpush1.msra.mxu0 0.0
    %494 = vmatprep.subr.mxu0 0.0
    %495 = vmatpush1.msra.mxu0 0.0
    %496 = vmatprep.subr.mxu0 0.0
    %497 = vmatpush1.msra.mxu0 0.0
    %498 = vmatprep.subr.mxu0 0.0
    %499 = vmatpush1.msra.mxu0 0.0
    %500 = vmatprep.subr.mxu0 0.0
    %501 = vmatpush1.msra.mxu0 0.0
    %502 = vmatprep.subr.mxu0 0.0
    %503 = vmatpush1.msra.mxu0 0.0
    %504 = vmatprep.subr.mxu0 0.0
    %505 = vmatpush1.msra.mxu0 0.0
    %506 = vmatprep.subr.mxu0 0.0
    %507 = vmatpush1.msra.mxu0 0.0
    %508 = vmatprep.subr.mxu0 0.0
    %509 = vmatpush1.msra.mxu0 0.0
    %510 = vmatprep.subr.mxu0 0.0
    %511 = vmatpush1.msra.mxu0 0.0
    %512 = vmatprep.subr.mxu0 0.0
    %513 = vmatpush1.msra.mxu0 0.0
    %514 = vmatprep.subr.mxu0 0.0
    %515 = vmatpush1.msra.mxu0 0.0
    %516 = vmatprep.subr.mxu0 0.0
    %517 = vmatpush1.msra.mxu0 0.0
    %518 = vmatprep.subr.mxu0 0.0
    %519 = vmatpush1.msra.mxu0 0.0
    %520 = vmatprep.subr.mxu0 0.0
    %521 = vmatpush1.msra.mxu0 0.0
    %522 = vmatprep.subr.mxu0 0.0
    %523 = vmatpush1.msra.mxu0 0.0
    %524 = vmatprep.subr.mxu0 0.0
    %525 = vmatpush1.msra.mxu0 0.0
    %526 = vmatprep.subr.mxu0 0.0
    %527 = vmatpush1.msra.mxu0 0.0
    %528 = vmatprep.subr.mxu0 0.0
    %529 = vmatpush1.msra.mxu0 0.0
    %530 = vmatprep.subr.mxu0 0.0
    %531 = vmatpush1.msra.mxu0 0.0
    %532 = vmatprep.subr.mxu0 0.0
    %533 = vmatpush1.msra.mxu0 0.0
    %534 = vmatprep.mubr.f32.mxu0 0.0
    %535 = vmatmul.mubr.f32.gmra.mrb[0].mxu0 %v468
    %v536 = vpop.f32.mrb[0].mxu0
    %v537 = vadd.f32 0.0, %v536
    %v538 = vpop.f32.mrb[0].mxu0
    %539 = vdwg.mxu0
    %540 = vxpose.xlu0.b32.start [1/16] %v422, 128
    %541 = vxpose.xlu0.b32.cont [2/16] 0.0, 128
    %542 = vxpose.xlu0.b32.cont [3/16] 0.0, 128
    %543 = vxpose.xlu0.b32.cont [4/16] 0.0, 128
    %544 = vxpose.xlu0.b32.cont [5/16] 0.0, 128
    %545 = vxpose.xlu0.b32.cont [6/16] 0.0, 128
    %546 = vxpose.xlu0.b32.cont [7/16] 0.0, 128
    %547 = vxpose.xlu0.b32.cont [8/16] 0.0, 128
    %548 = vxpose.xlu0.b32.cont [9/16] 0.0, 128
    %549 = vxpose.xlu0.b32.cont [10/16] 0.0, 128
    %550 = vxpose.xlu0.b32.cont [11/16] 0.0, 128
    %551 = vxpose.xlu0.b32.cont [12/16] 0.0, 128
    %552 = vxpose.xlu0.b32.cont [13/16] 0.0, 128
    %553 = vxpose.xlu0.b32.cont [14/16] 0.0, 128
    %554 = vxpose.xlu0.b32.cont [15/16] 0.0, 128
    %555 = vxpose.xlu0.b32.end [16/16] 0.0, 128
    %v556 = vpop.trf.xlu0
    %v557 = vpop.trf.xlu0
    %v558 = vpop.trf.xlu0
    %v559 = vpop.trf.xlu0
    %v560 = vpop.trf.xlu0
    %v561 = vpop.trf.xlu0
    %v562 = vpop.trf.xlu0
    %v563 = vpop.trf.xlu0
    %v564 = vpop.trf.xlu0
    %v565 = vpop.trf.xlu0
    %v566 = vpop.trf.xlu0
    %v567 = vpop.trf.xlu0
    %v568 = vpop.trf.xlu0
    %v569 = vpop.trf.xlu0
    %v570 = vpop.trf.xlu0
    %v571 = vpop.trf.xlu0
    %v573 = vsel %vm410, %v556, 0
    %575 = vmatprep.subr.mxu0 0.0
    %576 = vmatpush1.msra.mxu0 %v434
    %577 = vmatprep.subr.mxu0 0.0
    %578 = vmatpush1.msra.mxu0 0.0
    %579 = vmatprep.subr.mxu0 0.0
    %580 = vmatpush1.msra.mxu0 0.0
    %581 = vmatprep.subr.mxu0 0.0
    %582 = vmatpush1.msra.mxu0 0.0
    %583 = vmatprep.subr.mxu0 0.0
    %584 = vmatpush1.msra.mxu0 0.0
    %585 = vmatprep.subr.mxu0 0.0
    %586 = vmatpush1.msra.mxu0 0.0
    %587 = vmatprep.subr.mxu0 0.0
    %588 = vmatpush1.msra.mxu0 0.0
    %589 = vmatprep.subr.mxu0 0.0
    %590 = vmatpush1.msra.mxu0 0.0
    %591 = vmatprep.subr.mxu0 0.0
    %592 = vmatpush1.msra.mxu0 0.0
    %593 = vmatprep.subr.mxu0 0.0
    %594 = vmatpush1.msra.mxu0 0.0
    %595 = vmatprep.subr.mxu0 0.0
    %596 = vmatpush1.msra.mxu0 0.0
    %597 = vmatprep.subr.mxu0 0.0
    %598 = vmatpush1.msra.mxu0 0.0
    %599 = vmatprep.subr.mxu0 0.0
    %600 = vmatpush1.msra.mxu0 0.0
    %601 = vmatprep.subr.mxu0 0.0
    %602 = vmatpush1.msra.mxu0 0.0
    %603 = vmatprep.subr.mxu0 0.0
    %604 = vmatpush1.msra.mxu0 0.0
    %605 = vmatprep.subr.mxu0 0.0
    %606 = vmatpush1.msra.mxu0 0.0
    %607 = vmatprep.subr.mxu0 0.0
    %608 = vmatpush1.msra.mxu0 0.0
    %609 = vmatprep.subr.mxu0 0.0
    %610 = vmatpush1.msra.mxu0 0.0
    %611 = vmatprep.subr.mxu0 0.0
    %612 = vmatpush1.msra.mxu0 0.0
    %613 = vmatprep.subr.mxu0 0.0
    %614 = vmatpush1.msra.mxu0 0.0
    %615 = vmatprep.subr.mxu0 0.0
    %616 = vmatpush1.msra.mxu0 0.0
    %617 = vmatprep.subr.mxu0 0.0
    %618 = vmatpush1.msra.mxu0 0.0
    %619 = vmatprep.subr.mxu0 0.0
    %620 = vmatpush1.msra.mxu0 0.0
    %621 = vmatprep.subr.mxu0 0.0
    %622 = vmatpush1.msra.mxu0 0.0
    %623 = vmatprep.subr.mxu0 0.0
    %624 = vmatpush1.msra.mxu0 0.0
    %625 = vmatprep.subr.mxu0 0.0
    %626 = vmatpush1.msra.mxu0 0.0
    %627 = vmatprep.subr.mxu0 0.0
    %628 = vmatpush1.msra.mxu0 0.0
    %629 = vmatprep.subr.mxu0 0.0
    %630 = vmatpush1.msra.mxu0 0.0
    %631 = vmatprep.subr.mxu0 0.0
    %632 = vmatpush1.msra.mxu0 0.0
    %633 = vmatprep.subr.mxu0 0.0
    %634 = vmatpush1.msra.mxu0 0.0
    %635 = vmatprep.subr.mxu0 0.0
    %636 = vmatpush1.msra.mxu0 0.0
    %637 = vmatprep.subr.mxu0 0.0
    %638 = vmatpush1.msra.mxu0 0.0
    %639 = vmatprep.mubr.f32.mxu0 0.0
    %640 = vmatmul.mubr.f32.gmra.mrb[0].mxu0 %v573
    %v641 = vpop.f32.mrb[0].mxu0
    %v642 = vadd.f32 0.0, %v641
    %v643 = vpop.f32.mrb[0].mxu0
    %644 = vdwg.mxu0
    %v645 = vld [vmem:[%s3] sm:$0x1]
    %v647 = vunpack.c.l.s4 1934713408
    %v648 = vunpack.c.0.s8 %v647
    %v649 = vlaneseq
    %v650 = vshrl.u32 %v649, 7
    %v651 = vsub.s32 %v648, %v650
    %v652 = vcombine.high 0.0, 0.0
    %654 = vrot.lane.b32.xlu0 %v652, 8
    %v655 = vpop.permute.xlu0 %654
    %v657 = vsel %vm410, 0.0, %v655
    %658 = vmatprep.subr.mxu0 0.0
    %659 = vmatpush1.xpose.msra.mxu0 %v537
    %660 = vmatprep.subr.mxu0 0.0
    %661 = vmatpush1.xpose.msra.mxu0 %v642
    %662 = vmatprep.subr.mxu0 0.0
    %663 = vmatpush1.xpose.msra.mxu0 0.0
    %664 = vmatprep.subr.mxu0 0.0
    %665 = vmatpush1.xpose.msra.mxu0 0.0
    %666 = vmatprep.subr.mxu0 0.0
    %667 = vmatpush1.xpose.msra.mxu0 0.0
    %668 = vmatprep.subr.mxu0 0.0
    %669 = vmatpush1.xpose.msra.mxu0 0.0
    %670 = vmatprep.subr.mxu0 0.0
    %671 = vmatpush1.xpose.msra.mxu0 0.0
    %672 = vmatprep.subr.mxu0 0.0
    %673 = vmatpush1.xpose.msra.mxu0 0.0
    %674 = vmatprep.subr.mxu0 0.0
    %675 = vmatpush1.xpose.msra.mxu0 0.0
    %676 = vmatprep.subr.mxu0 0.0
    %677 = vmatpush1.xpose.msra.mxu0 0.0
    %678 = vmatprep.subr.mxu0 0.0
    %679 = vmatpush1.xpose.msra.mxu0 0.0
    %680 = vmatprep.subr.mxu0 0.0
    %681 = vmatpush1.xpose.msra.mxu0 0.0
    %682 = vmatprep.subr.mxu0 0.0
    %683 = vmatpush1.xpose.msra.mxu0 0.0
    %684 = vmatprep.subr.mxu0 0.0
    %685 = vmatpush1.xpose.msra.mxu0 0.0
    %686 = vmatprep.subr.mxu0 0.0
    %687 = vmatpush1.xpose.msra.mxu0 0.0
    %688 = vmatprep.subr.mxu0 0.0
    %689 = vmatpush1.xpose.msra.mxu0 0.0
    %690 = vmatprep.subr.mxu0 0.0
    %691 = vmatpush1.xpose.msra.mxu0 0.0
    %692 = vmatprep.subr.mxu0 0.0
    %693 = vmatpush1.xpose.msra.mxu0 0.0
    %694 = vmatprep.subr.mxu0 0.0
    %695 = vmatpush1.xpose.msra.mxu0 0.0
    %696 = vmatprep.subr.mxu0 0.0
    %697 = vmatpush1.xpose.msra.mxu0 0.0
    %698 = vmatprep.subr.mxu0 0.0
    %699 = vmatpush1.xpose.msra.mxu0 0.0
    %700 = vmatprep.subr.mxu0 0.0
    %701 = vmatpush1.xpose.msra.mxu0 0.0
    %702 = vmatprep.subr.mxu0 0.0
    %703 = vmatpush1.xpose.msra.mxu0 0.0
    %704 = vmatprep.subr.mxu0 0.0
    %705 = vmatpush1.xpose.msra.mxu0 0.0
    %706 = vmatprep.subr.mxu0 0.0
    %707 = vmatpush1.xpose.msra.mxu0 0.0
    %708 = vmatprep.subr.mxu0 0.0
    %709 = vmatpush1.xpose.msra.mxu0 0.0
    %710 = vmatprep.subr.mxu0 0.0
    %711 = vmatpush1.xpose.msra.mxu0 0.0
    %712 = vmatprep.subr.mxu0 0.0
    %713 = vmatpush1.xpose.msra.mxu0 0.0
    %714 = vmatprep.subr.mxu0 0.0
    %715 = vmatpush1.xpose.msra.mxu0 0.0
    %716 = vmatprep.subr.mxu0 0.0
    %717 = vmatpush1.xpose.msra.mxu0 0.0
    %718 = vmatprep.subr.mxu0 0.0
    %719 = vmatpush1.xpose.msra.mxu0 0.0
    %720 = vmatprep.subr.mxu0 0.0
    %721 = vmatpush1.xpose.msra.mxu0 0.0
    %722 = vmatprep.mubr.f32.mxu0 0.0
    %723 = vmatmul.mubr.f32.gmra.mrb[0].mxu0 %v645
    %v724 = vpop.f32.mrb[0].mxu0
    %v725 = vadd.f32 %v657, %v724
    %v726 = vpop.f32.mrb[0].mxu0
    %727 = vdwg.mxu0
    %729 = vrot.lane.b32.xlu0 %v725, 120
    %v730 = vpop.permute.xlu0 %729
    %v732 = vcombine.low %v725, %v730
    %v734 = vunpack.c.l.s4 1934713408
    %v735 = vunpack.c.0.s8 %v734
    %v736 = vlaneseq
    %v737 = vshrl.u32 %v736, 7
    %v738 = vsub.s32 %v735, %v737
    %v739 = vrot.slane %v732, %v738
    %vm740 = vcmask 58368
    %v741 = vsel %vm740, %v739, 0.0
    %742 = vadd.xlane.f32.xlu0 %v741
    %v743 = vpop.xlane.xlu0 %742
    %v744 = vld [vmem:[#allocation2] sm:$0x1]
    %746 = vset.pattern.permute.xlu0 0
    %747 = vperm.xlu0 %746, %v744
    %v748 = vpop.permute.xlu0 %747
    %v750 = vlaneseq
    %v751 = vshrl.u32 %v750, 7
    %v752 = vsub.s32 0, %v751
    %v753 = vrot.slane %v748, %v752
    %v754 = vadd.f32 %v743, %v753
    %v755 = vxor.u32 %v754, 2147483648
    %v756 = vmul.f32 %v755, 1.442695
    %v757 = vpow.pop %v756
    %v758 = vadd.f32 %v757, 1.0
    %v759 = vrcp.pop %v758
    %v760 = vmul.f32 1.0, %v759
    %v762 = vlaneseq
    %v763 = vand.u32 %v762, 127
    %v764 = vlaneseq
    %v765 = vshrl.u32 %v764, 7
    %v766 = vsub.s32 %v763, %v765
    %v767 = vrot.slane %v760, %v766
    %vm769 = vcmask 8192
    %770 = vst.msk [vmem:[#allocation8] sm:$0x1] %vm769, %v767
    // Predicated region
    $region30: #{tpu_custom_call.1} parent=1 // pred_check
      _
    $region31: #{tpu_custom_call.1} parent=1 // pred_check_branch
      %772 = sbr.rel (0) target = $region33
    $region32: #{tpu_custom_call.1} parent=1 // pred_region
      %s774 = ssub.s32 16, 16
      %775 = vsyncadd [#allocation5], %s774
      %s777 = sshll.u32 [#allocation8], 4
      %s778 = int_to_ptr.vmem [resolvable:$true] %s777
      %780 = dma.vmem_to_hbm [thread:$0]  %s778, 16, %s5, [#allocation5]
    $region33: #{tpu_custom_call.1} parent=1 // pred_fallthru
      _
    // Predicated region
    $region34: #{tpu_custom_call.1} parent=1 // pred_check
      _
    $region35: #{tpu_custom_call.1} parent=1 // pred_check_branch
      %782 = sbr.rel (0) target = $region37
    $region36: #{tpu_custom_call.1} parent=1 // pred_region
      %783 = dma.done [#allocation5], 16
    $region37: #{tpu_custom_call.1} parent=1 // pred_fallthru
      _
    %784 = vsyncpa [#allocation4], 1
    %785 = vsyncpa [#allocation7], 1
    %786 = vsyncpa [#allocation5], 1

</llo_original>
